<compile_context>
chip_gen: v7x
topology: tpu7x:2x2x1
jax: 0.10.0
libtpu: 0.0.40
codegen_flags: <defaults>
</compile_context>

<pallas_src>
import jax
import jax.numpy as jnp
import numpy as np
from jax.experimental import pallas as pl
from jax.experimental.pallas import tpu as pltpu


def cbt_head_kernel(xx_ref, pos_ref, w_ref, b_ref, out_ref):
    bt, s, h = xx_ref.shape
    nf = w_ref.shape[1]

    # Token features: cast to bf16 in-kernel (no extra HBM pass; no-op if already bf16).
    xx = xx_ref[...].reshape(bt * s, h).astype(w_ref.dtype)

    # One fused MXU pass: all Bt*S tokens x all four packed taggers [ss | se | os(R) | oe(R)].
    logits = jnp.dot(xx, w_ref[...], preferred_element_type=jnp.float32)   # (Bt*S, Nf) f32
    logits = logits.reshape(bt, s, nf)

    # Lane-dense layout for everything downstream: S sits on the 128-lane axis.
    logits_t = jnp.transpose(logits, (0, 2, 1))                            # (Bt, Nf, S)

    # Object-head correction via linearity, reusing logits (no extra MXU work on xx):
    #   dot(xx + sub_feat, W) = logits + (pos @ logits) / sum(pos)
    pos = pos_ref[...]                                                     # (Bt, 1, S) f32
    wsum = jnp.sum(pos * logits_t, axis=2, keepdims=True)                  # (Bt, Nf, 1) VPU+XLU
    den = jnp.maximum(jnp.sum(pos, axis=2, keepdims=True), 1.0)            # (Bt, 1, 1)  den==0 guard
    corr = wsum * pl.reciprocal(den, approx=True)                          # (Bt, Nf, 1) EUP recip
    # Only the object heads (packed rows >= 2) see the subject feature; keep this mask
    # in lockstep with the wrapper's concatenate order [ss | se | os(R) | oe(R)].
    row = jax.lax.broadcasted_iota(jnp.int32, (1, nf, 1), 1)
    corr = jnp.where(row >= 2, corr, 0.0)

    # Bias (Nf, 1) + correction broadcast over the lane-dense S axis; f32 sigmoid.
    out_ref[...] = jax.nn.sigmoid(logits_t + b_ref[...] + corr)            # (Bt, Nf, S)


def _pick_bt(B, max_bt=8):
    # Largest divisor of B that is <= max_bt while leaving >= 2 grid steps
    # (so the 'parallel' batch axis can shard across both TensorCores on v7x).
    best = 1
    for cand in range(1, min(B, max_bt) + 1):
        if B % cand == 0 and (B // cand >= 2 or B == 1):
            best = cand
    return best


def cbt_head(xx, sub_pos, params, *, bt=None):
    """xx: [B,S,H] float (f32 or bf16), sub_pos: [B,S] 0/1 mask.
    Returns (sub_start, sub_end, obj_start, obj_end) as in the PyTorch module."""
    B, S, H = xx.shape
    R = params["w_os"].shape[1]
    Nf = 2 + 2 * R

    if bt is None:
        bt = _pick_bt(B)
    assert B % bt == 0

    # Pack the four taggers into one weight / one bias (wrapper-side glue; order matters
    # for the in-kernel `row >= 2` object-head mask).
    w_all = jnp.concatenate(
        [params["w_ss"], params["w_se"], params["w_os"], params["w_oe"]], axis=1
    ).astype(jnp.bfloat16)                                           # (H, Nf)
    b_all = jnp.concatenate(
        [params["b_ss"], params["b_se"], params["b_os"], params["b_oe"]], axis=1
    ).astype(jnp.float32).T                                          # (Nf, 1)

    pos = sub_pos.reshape(B, 1, S).astype(jnp.float32)               # subject mask as row vec

    # VMEM budget: double-buffered blocks + resident weights, with headroom; clamped to
    # stay under v7x's 64 MiB physical VMEM while covering v5e's 16 MiB scoped default.
    blk_bytes = 2 * (bt * S * H * xx.dtype.itemsize
                     + bt * S * 4 + bt * Nf * S * 4) + (H * Nf * 2 + Nf * 4)
    vmem_limit = int(min(max(2 * blk_bytes + (8 << 20), 32 << 20), 48 << 20))

    out = pl.pallas_call(
        cbt_head_kernel,
        out_shape=jax.ShapeDtypeStruct((B, Nf, S), jnp.float32),
        grid_spec=pltpu.PrefetchScalarGridSpec(
            num_scalar_prefetch=0,
            grid=(B // bt,),
            in_specs=[
                pl.BlockSpec((bt, S, H), lambda i: (i, 0, 0)),   # xx (f32 or bf16)
                pl.BlockSpec((bt, 1, S), lambda i: (i, 0, 0)),   # subject-position mask
                pl.BlockSpec((H, Nf), lambda i: (0, 0)),         # packed weights (bf16)
                pl.BlockSpec((Nf, 1), lambda i: (0, 0)),         # packed biases (f32)
            ],
            out_specs=pl.BlockSpec((bt, Nf, S), lambda i: (i, 0, 0)),
        ),
        compiler_params=pltpu.CompilerParams(
            dimension_semantics=("parallel",),   # batch axis shards across TCs (v7x)
            vmem_limit_bytes=vmem_limit,
        ),
    )(xx, pos, w_all, b_all)

    # Split the lane-dense fused output back into the module's four outputs.
    ss = out[:, 0, :]                                                # (B, S)
    se = out[:, 1, :]                                                # (B, S)
    os_ = jnp.transpose(out[:, 2:2 + R, :], (0, 2, 1))               # (B, S, R)
    oe = jnp.transpose(out[:, 2 + R:, :], (0, 2, 1))                 # (B, S, R)
    return ss, se, os_, oe


def cbt_head_ref(xx, sub_pos, params):
    """Plain-JAX reference mirroring the PyTorch forward (with bf16-rounded matmul
    inputs to match the kernel's numerics)."""
    f32 = jnp.float32
    rb = lambda a: a.astype(jnp.bfloat16).astype(f32)
    xb = rb(xx)
    ss = jax.nn.sigmoid(xb @ rb(params["w_ss"]) + params["b_ss"][0])[..., 0]
    se = jax.nn.sigmoid(xb @ rb(params["w_se"]) + params["b_se"][0])[..., 0]
    mask = sub_pos[..., None].astype(f32)                            # (B,S,1)
    sub_feat = jnp.sum(mask * xb, axis=1) / jnp.sum(mask, axis=1)
    tok = xb + sub_feat[:, None, :]
    os_ = jax.nn.sigmoid(tok @ rb(params["w_os"]) + params["b_os"][0])
    oe_ = jax.nn.sigmoid(tok @ rb(params["w_oe"]) + params["b_oe"][0])
    return ss, se, os_, oe_


if __name__ == "__main__":
    B, S, H, R, V = 2, 8, 32, 4, 50   # batch, seq, hidden_dim, rel_num, vocab

    key = jax.random.PRNGKey(0)
    k_emb, k1, k2, k3, k4, k5, k6, k7, k8, k_ids = jax.random.split(key, 10)

    # deterministic parameter init (synthetic weights, nn.Linear-shaped)
    scale = 1.0 / np.sqrt(H)
    params = {
        "w_ss": jax.random.uniform(k1, (H, 1), jnp.float32, -scale, scale),
        "b_ss": jax.random.uniform(k2, (1, 1), jnp.float32, -scale, scale),
        "w_se": jax.random.uniform(k3, (H, 1), jnp.float32, -scale, scale),
        "b_se": jax.random.uniform(k4, (1, 1), jnp.float32, -scale, scale),
        "w_os": jax.random.uniform(k5, (H, R), jnp.float32, -scale, scale),
        "b_os": jax.random.uniform(k6, (1, R), jnp.float32, -scale, scale),
        "w_oe": jax.random.uniform(k7, (H, R), jnp.float32, -scale, scale),
        "b_oe": jax.random.uniform(k8, (1, R), jnp.float32, -scale, scale),
    }
    word_emb = jax.random.normal(k_emb, (V, H), jnp.float32)

    # inputs: (input_ids, attention_mask, sub_pos)
    input_ids = jax.random.randint(k_ids, (B, S), 0, V)
    attention_mask = jnp.ones((B, S), jnp.float32)          # unused by the embedding stub
    sub_pos = jnp.zeros((B, S), jnp.float32).at[:, 1].set(1.0).at[:, 3].set(1.0)

    # "bert(...)[0]" stub: embedding lookup (plain-JAX glue)
    xx = word_emb[input_ids]                                 # (B, S, H) f32

    outs = cbt_head(xx, sub_pos, params)
    outs = jax.block_until_ready(outs)

    # sanity-check against the plain-JAX reference (tolerance accounts for the bf16
    # matmul and the EUP approx reciprocal in the masked mean)
    refs = cbt_head_ref(xx, sub_pos, params)
    for o, r in zip(outs, refs):
        np.testing.assert_allclose(np.asarray(o), np.asarray(r), atol=5e-3, rtol=5e-3)

    assert outs[0].shape == (B, S) and outs[1].shape == (B, S)
    assert outs[2].shape == (B, S, R) and outs[3].shape == (B, S, R)

    print("KERNEL_OK")
</pallas_src>

<mosaic_0001>
module attributes {stable_mosaic.version = 11 : i64} {
  func.func @cbt_head_kernel(%arg0: i32, %arg1: memref<1x8x32xf32, #tpu.memory_space<vmem>>, %arg2: memref<1x1x8xf32, #tpu.memory_space<vmem>>, %arg3: memref<32x10xbf16, #tpu.memory_space<vmem>>, %arg4: memref<10x1xf32, #tpu.memory_space<vmem>>, %arg5: memref<1x10x8xf32, #tpu.memory_space<vmem>>) attributes {dimension_semantics = [#tpu.dimension_semantics<parallel>], iteration_bounds = array<i64: 2>, scalar_prefetch = 0 : i64, scratch_operands = 0 : i64, tpu.core_type = #tpu.core_type<tc>, window_params = [{transform_indices = @transform_0, window_bounds = array<i64: 1, 8, 32>}, {transform_indices = @transform_1, window_bounds = array<i64: 1, 1, 8>}, {pipeline_mode = #tpu.pipeline_mode<synchronous>, transform_indices = @transform_2, window_bounds = array<i64: 32, 10>}, {pipeline_mode = #tpu.pipeline_mode<synchronous>, transform_indices = @transform_3, window_bounds = array<i64: 10, 1>}, {transform_indices = @transform_4, window_bounds = array<i64: 1, 10, 8>}]} {
    %c0 = arith.constant 0 : index
    %c0_0 = arith.constant 0 : index
    %c0_1 = arith.constant 0 : index
    %0 = vector.load %arg1[%c0, %c0_0, %c0_1] : memref<1x8x32xf32, #tpu.memory_space<vmem>>, vector<1x8x32xf32>
    %1 = vector.shape_cast %0 : vector<1x8x32xf32> to vector<8x32xf32>
    %2 = arith.truncf %1 : vector<8x32xf32> to vector<8x32xbf16>
    %c0_2 = arith.constant 0 : index
    %c0_3 = arith.constant 0 : index
    %3 = vector.load %arg3[%c0_2, %c0_3] : memref<32x10xbf16, #tpu.memory_space<vmem>>, vector<32x10xbf16>
    %cst = arith.constant dense<0.000000e+00> : vector<8x10xf32>
    %4 = tpu.matmul %2, %3, %cst {dimension_numbers = #tpu.dot_dimension_numbers<[1], [0], [0], [1], [0, 0, 1, 1], [], []>} : vector<8x32xbf16>, vector<32x10xbf16>, vector<8x10xf32> -> vector<8x10xf32>
    %5 = vector.shape_cast %4 : vector<8x10xf32> to vector<1x8x10xf32>
    %6 = tpu.transpose %5, [0, 2, 1] : vector<1x8x10xf32> -> vector<1x10x8xf32>
    %c0_4 = arith.constant 0 : index
    %c0_5 = arith.constant 0 : index
    %c0_6 = arith.constant 0 : index
    %7 = vector.load %arg2[%c0_4, %c0_5, %c0_6] : memref<1x1x8xf32, #tpu.memory_space<vmem>>, vector<1x1x8xf32>
    %8 = vector.broadcast %7 : vector<1x1x8xf32> to vector<1x10x8xf32>
    %9 = arith.mulf %8, %6 : vector<1x10x8xf32>
    %cst_7 = arith.constant dense<0.000000e+00> : vector<1x10xf32>
    %10 = vector.multi_reduction <add>, %9, %cst_7 [2] : vector<1x10x8xf32> to vector<1x10xf32>
    %11 = vector.shape_cast %10 : vector<1x10xf32> to vector<1x10x1xf32>
    %cst_8 = arith.constant dense<0.000000e+00> : vector<1x1xf32>
    %12 = vector.multi_reduction <add>, %7, %cst_8 [2] : vector<1x1x8xf32> to vector<1x1xf32>
    %13 = vector.shape_cast %12 : vector<1x1xf32> to vector<1x1x1xf32>
    %cst_9 = arith.constant 1.000000e+00 : f32
    %14 = vector.broadcast %cst_9 : f32 to vector<1x1x1xf32>
    %15 = arith.maximumf %13, %14 : vector<1x1x1xf32>
    %16 = tpu.reciprocal %15 {approx = true} : vector<1x1x1xf32> -> vector<1x1x1xf32>
    %17 = vector.broadcast %16 : vector<1x1x1xf32> to vector<1x10x1xf32>
    %18 = arith.mulf %11, %17 : vector<1x10x1xf32>
    %19 = tpu.iota {dimensions = array<i32: 1>} : vector<1x10x1xi32>
    %c2_i32 = arith.constant 2 : i32
    %20 = vector.broadcast %c2_i32 : i32 to vector<1x10x1xi32>
    %21 = arith.cmpi sge, %19, %20 : vector<1x10x1xi32>
    %cst_10 = arith.constant 0.000000e+00 : f32
    %22 = vector.broadcast %cst_10 : f32 to vector<1x10x1xf32>
    %23 = arith.select %21, %18, %22 : vector<1x10x1xi1>, vector<1x10x1xf32>
    %c0_11 = arith.constant 0 : index
    %c0_12 = arith.constant 0 : index
    %24 = vector.load %arg4[%c0_11, %c0_12] : memref<10x1xf32, #tpu.memory_space<vmem>>, vector<10x1xf32>
    %25 = vector.shape_cast %24 : vector<10x1xf32> to vector<1x10x1xf32>
    %26 = vector.broadcast %25 : vector<1x10x1xf32> to vector<1x10x8xf32>
    %27 = arith.addf %6, %26 : vector<1x10x8xf32>
    %28 = vector.broadcast %23 : vector<1x10x1xf32> to vector<1x10x8xf32>
    %29 = arith.addf %27, %28 : vector<1x10x8xf32>
    %30 = arith.negf %29 : vector<1x10x8xf32>
    %31 = math.exp %30 : vector<1x10x8xf32>
    %cst_13 = arith.constant 1.000000e+00 : f32
    %32 = vector.broadcast %cst_13 : f32 to vector<1x10x8xf32>
    %33 = arith.addf %32, %31 : vector<1x10x8xf32>
    %34 = arith.divf %32, %33 : vector<1x10x8xf32>
    %c0_14 = arith.constant 0 : index
    %c0_15 = arith.constant 0 : index
    %c0_16 = arith.constant 0 : index
    %35 = vector.load %arg5[%c0_14, %c0_15, %c0_16] : memref<1x10x8xf32, #tpu.memory_space<vmem>>, vector<1x10x8xf32>
    tpu.vector_store %arg5[%c0_14, %c0_15, %c0_16], %34 {strides = array<i32>} : memref<1x10x8xf32, #tpu.memory_space<vmem>>, vector<1x10x8xf32>,
    return
  }
  func.func @transform_0(%arg0: i32) -> (i32, i32, i32) {
    %c0_i32 = arith.constant 0 : i32
    %c0_i32_0 = arith.constant 0 : i32
    %c0_i32_1 = arith.constant 0 : i32
    return %arg0, %c0_i32, %c0_i32_0 : i32, i32, i32
  }
  func.func @transform_1(%arg0: i32) -> (i32, i32, i32) {
    %c0_i32 = arith.constant 0 : i32
    %c0_i32_0 = arith.constant 0 : i32
    %c0_i32_1 = arith.constant 0 : i32
    return %arg0, %c0_i32, %c0_i32_0 : i32, i32, i32
  }
  func.func @transform_2(%arg0: i32) -> (i32, i32) {
    %c0_i32 = arith.constant 0 : i32
    %c0_i32_0 = arith.constant 0 : i32
    %c0_i32_1 = arith.constant 0 : i32
    return %c0_i32, %c0_i32_0 : i32, i32
  }
  func.func @transform_3(%arg0: i32) -> (i32, i32) {
    %c0_i32 = arith.constant 0 : i32
    %c0_i32_0 = arith.constant 0 : i32
    %c0_i32_1 = arith.constant 0 : i32
    return %c0_i32, %c0_i32_0 : i32, i32
  }
  func.func @transform_4(%arg0: i32) -> (i32, i32, i32) {
    %c0_i32 = arith.constant 0 : i32
    %c0_i32_0 = arith.constant 0 : i32
    %c0_i32_1 = arith.constant 0 : i32
    return %arg0, %c0_i32, %c0_i32_0 : i32, i32, i32
  }
}

</mosaic_0001>

<llo_original>
// kernel: tpu_custom_call.1
$region0: #{tpu_custom_call.1}
  #allocation0 [shape = 'u32[]', space=smem, size = 0x4, offset = 0x4, fixed_abs, tag = 'smem constant byte address 0x4 - core index']
  #allocation1 [shape = 'u32[144,128]{1,0:T(1,128)}', space=vmem, size = 0x12000, scoped, tag = 'internal scratch']
  %s0 = inlined_call_operand.vmem [shape: f32[2,8,32], index: 0, kind: input, shape index: {}]
  %s1 = inlined_call_operand.vmem [shape: f32[2,1,8], index: 1, kind: input, shape index: {}]
  %s2 = inlined_call_operand.vmem [shape: bf16[32,10], index: 2, kind: input, shape index: {}]
  %s3 = inlined_call_operand.vmem [shape: f32[10,1], index: 3, kind: input, shape index: {}]
  %s4 = inlined_call_operand.vmem [shape: f32[2,10,8], index: 4, kind: output, shape index: {}]
  %s5 = sld [smem:[#allocation0]]
  $region49: #{tpu_custom_call.1} parent=0
    _
  %s7 = ssub.s32 1, %s5
  %s8 = scalar_select 0, %s7, %s5
  loop: start=0, step=1, limit=4
  $region2: #{tpu_custom_call.1} parent=0 // loop_pre_header
    _
  $region3: #{tpu_custom_call.1} parent=0 // loop_header
    %s10 = sphi 0, %s14
    %p11 = scmp.ge.s32.totalorder %s10, 4
    %s20 = sphi 0, %s22
    %s23 = sphi 0, %s20
    %s24 = sphi 0, %s23
    %s40 = sphi 0, %s24
    %s46 = sphi 0, %s48
    %s49 = sphi 0, %s46
    %s50 = sphi 0, %s49
    %s66 = sphi 0, %s50
    %s70 = sphi 0, %s70
    %s72 = sphi 0, %s70
    %s73 = sphi 0, %s72
    %s87 = sphi 0, %s73
    %s91 = sphi 0, %s91
    %s93 = sphi 0, %s91
    %s94 = sphi 0, %s93
    %s108 = sphi 0, %s94
    %s114 = sphi 0, %s116
    %s117 = sphi 0, %s114
    %s118 = sphi 0, %s117
    %s134 = sphi 0, %s118
  $region4: #{tpu_custom_call.1} parent=0 // loop_header_branch
    %13 = sbr.rel (%p11) target = $region8
  $region5: #{tpu_custom_call.1} parent=0 // loop_body
    %s15 = ssub.s32 %s10, 1
    %s16 = ssub.s32 %s10, 2
    %s17 = sadd.s32 %s10, 1
    %s18 = ssub.s32 %s10, %s17
    %p19 = scmp.eq.s32.totalorder %s18, 0
    %s21 = sadd.s32 %s20, 1
    %s22 = scalar_select %p19, %s20, %s21
    %p25 = pneg %p19
    %p26 = scmp.eq.s32.totalorder %s10, 1
    %p27 = por %p25, %p26
    %p28 = scmp.ne.s32.totalorder %s20, %s23
    %p29 = scmp.eq.s32.totalorder %s10, 0
    %p30 = por %p28, %p29
    %p31 = scmp.ne.s32.totalorder %s20, %s23
    %p32 = scmp.eq.s32.totalorder %s15, 1
    %p33 = por %p31, %p32
    %p34 = scmp.ne.s32.totalorder %s23, %s24
    %p35 = scmp.eq.s32.totalorder %s15, 0
    %p36 = por %p34, %p35
    %p37 = scmp.ne.s32.totalorder %s23, %s24
    %p38 = scmp.eq.s32.totalorder %s16, 1
    %p39 = por %p37, %p38
    %p41 = scmp.ne.s32.totalorder %s24, %s40
    %p42 = scmp.eq.s32.totalorder %s16, 0
    %p43 = por %p41, %p42
    %s44 = ssub.s32 %s10, %s17
    %p45 = scmp.eq.s32.totalorder %s44, 0
    %s47 = sadd.s32 %s46, 1
    %s48 = scalar_select %p45, %s46, %s47
    %p51 = pneg %p45
    %p52 = scmp.eq.s32.totalorder %s10, 1
    %p53 = por %p51, %p52
    %p54 = scmp.ne.s32.totalorder %s46, %s49
    %p55 = scmp.eq.s32.totalorder %s10, 0
    %p56 = por %p54, %p55
    %p57 = scmp.ne.s32.totalorder %s46, %s49
    %p58 = scmp.eq.s32.totalorder %s15, 1
    %p59 = por %p57, %p58
    %p60 = scmp.ne.s32.totalorder %s49, %s50
    %p61 = scmp.eq.s32.totalorder %s15, 0
    %p62 = por %p60, %p61
    %p63 = scmp.ne.s32.totalorder %s49, %s50
    %p64 = scmp.eq.s32.totalorder %s16, 1
    %p65 = por %p63, %p64
    %p67 = scmp.ne.s32.totalorder %s50, %s66
    %p68 = scmp.eq.s32.totalorder %s16, 0
    %p69 = por %p67, %p68
    %s71 = sadd.s32 %s70, 1
    %p74 = scmp.eq.s32.totalorder %s10, 1
    %p75 = scmp.ne.s32.totalorder %s70, %s72
    %p76 = scmp.eq.s32.totalorder %s10, 0
    %p77 = por %p75, %p76
    %p78 = scmp.ne.s32.totalorder %s70, %s72
    %p79 = scmp.eq.s32.totalorder %s15, 1
    %p80 = por %p78, %p79
    %p81 = scmp.ne.s32.totalorder %s72, %s73
    %p82 = scmp.eq.s32.totalorder %s15, 0
    %p83 = por %p81, %p82
    %p84 = scmp.ne.s32.totalorder %s72, %s73
    %p85 = scmp.eq.s32.totalorder %s16, 1
    %p86 = por %p84, %p85
    %p88 = scmp.ne.s32.totalorder %s73, %s87
    %p89 = scmp.eq.s32.totalorder %s16, 0
    %p90 = por %p88, %p89
    %s92 = sadd.s32 %s91, 1
    %p95 = scmp.eq.s32.totalorder %s10, 1
    %p96 = scmp.ne.s32.totalorder %s91, %s93
    %p97 = scmp.eq.s32.totalorder %s10, 0
    %p98 = por %p96, %p97
    %p99 = scmp.ne.s32.totalorder %s91, %s93
    %p100 = scmp.eq.s32.totalorder %s15, 1
    %p101 = por %p99, %p100
    %p102 = scmp.ne.s32.totalorder %s93, %s94
    %p103 = scmp.eq.s32.totalorder %s15, 0
    %p104 = por %p102, %p103
    %p105 = scmp.ne.s32.totalorder %s93, %s94
    %p106 = scmp.eq.s32.totalorder %s16, 1
    %p107 = por %p105, %p106
    %p109 = scmp.ne.s32.totalorder %s94, %s108
    %p110 = scmp.eq.s32.totalorder %s16, 0
    %p111 = por %p109, %p110
    %s112 = ssub.s32 %s10, %s17
    %p113 = scmp.eq.s32.totalorder %s112, 0
    %s115 = sadd.s32 %s114, 1
    %s116 = scalar_select %p113, %s114, %s115
    %p119 = pneg %p113
    %p120 = scmp.eq.s32.totalorder %s10, 1
    %p121 = por %p119, %p120
    %p122 = scmp.ne.s32.totalorder %s114, %s117
    %p123 = scmp.eq.s32.totalorder %s10, 0
    %p124 = por %p122, %p123
    %p125 = scmp.ne.s32.totalorder %s114, %s117
    %p126 = scmp.eq.s32.totalorder %s15, 1
    %p127 = por %p125, %p126
    %p128 = scmp.ne.s32.totalorder %s117, %s118
    %p129 = scmp.eq.s32.totalorder %s15, 0
    %p130 = por %p128, %p129
    %p131 = scmp.ne.s32.totalorder %s117, %s118
    %p132 = scmp.eq.s32.totalorder %s16, 1
    %p133 = por %p131, %p132
    %p135 = scmp.ne.s32.totalorder %s118, %s134
    %p136 = scmp.eq.s32.totalorder %s16, 0
    %p137 = por %p135, %p136
    %p138 = scmp.le.s32.totalorder 1, %s10
    %p139 = scmp.lt.s32.totalorder %s10, 3
    %p140 = pnand %p138, %p139
    %p141 = pneg %p140
    // Predicated region
    $region9: #{tpu_custom_call.1} parent=5 // pred_check
      _
    $region10: #{tpu_custom_call.1} parent=5 // pred_check_branch
      %143 = sbr.rel (%p140) target = $region12
    $region11: #{tpu_custom_call.1} parent=5 // pred_region
      %s144 = ssub.s32 %s10, 1
      // Predicated region
      $region13: #{tpu_custom_call.1} parent=11 // pred_check
        %p145 = pneg %p83
      $region14: #{tpu_custom_call.1} parent=11 // pred_check_branch
        %147 = sbr.rel (%p145) target = $region16
      $region15: #{tpu_custom_call.1} parent=11 // pred_region
        _
      $region16: #{tpu_custom_call.1} parent=11 // pred_fallthru
        _
      // Predicated region
      $region17: #{tpu_custom_call.1} parent=11 // pred_check
        %p148 = pneg %p104
      $region18: #{tpu_custom_call.1} parent=11 // pred_check_branch
        %150 = sbr.rel (%p148) target = $region20
      $region19: #{tpu_custom_call.1} parent=11 // pred_region
        _
      $region20: #{tpu_custom_call.1} parent=11 // pred_fallthru
        _
    $region12: #{tpu_custom_call.1} parent=5 // pred_fallthru
      _
    %p151 = scmp.lt.s32.totalorder %s10, 2
    // Predicated region
    $region21: #{tpu_custom_call.1} parent=5 // pred_check
      %p152 = pneg %p151
    $region22: #{tpu_custom_call.1} parent=5 // pred_check_branch
      %154 = sbr.rel (%p152) target = $region24
    $region23: #{tpu_custom_call.1} parent=5 // pred_region
      // Predicated region
      $region25: #{tpu_custom_call.1} parent=23 // pred_check
        %p155 = pneg %p30
      $region26: #{tpu_custom_call.1} parent=23 // pred_check_branch
        %157 = sbr.rel (%p155) target = $region28
      $region27: #{tpu_custom_call.1} parent=23 // pred_region
        %p158 = scmp.lt.s32.totalorder %s10, 1
        %s159 = scalar_select %p158, %s10, 1
        %s160 = smul.addr %s159, 8
        %s161 = scalar_lea.vmem %s0, %s160
      $region28: #{tpu_custom_call.1} parent=23 // pred_fallthru
        _
      // Predicated region
      $region29: #{tpu_custom_call.1} parent=23 // pred_check
        %p162 = pneg %p56
      $region30: #{tpu_custom_call.1} parent=23 // pred_check_branch
        %164 = sbr.rel (%p162) target = $region32
      $region31: #{tpu_custom_call.1} parent=23 // pred_region
        %p165 = scmp.lt.s32.totalorder %s10, 1
        %s166 = scalar_select %p165, %s10, 1
        %s167 = scalar_lea.vmem %s1, %s166
      $region32: #{tpu_custom_call.1} parent=23 // pred_fallthru
        _
    $region24: #{tpu_custom_call.1} parent=5 // pred_fallthru
      _
    %p168 = scmp.le.s32.totalorder 1, %s10
    %p169 = scmp.lt.s32.totalorder %s10, 3
    %p170 = pnand %p168, %p169
    %p171 = pneg %p170
    // Predicated region
    $region33: #{tpu_custom_call.1} parent=5 // pred_check
      _
    $region34: #{tpu_custom_call.1} parent=5 // pred_check_branch
      %173 = sbr.rel (%p170) target = $region36
    $region35: #{tpu_custom_call.1} parent=5 // pred_region
      %s174 = ssub.s32 %s10, 1
      %p175 = scmp.lt.s32.totalorder %s15, 1
      %s176 = scalar_select %p175, %s15, 1
      %s177 = smul.addr %s176, 8
      %s178 = scalar_lea.vmem %s0, %s177
      %p179 = pneg %p36
      %p180 = pneg %p33
      %p181 = scmp.lt.s32.totalorder %s15, 1
      %s182 = scalar_select %p181, %s15, 1
      %s183 = scalar_lea.vmem %s1, %s182
      %p184 = pneg %p62
      %p185 = pneg %p59
      %p186 = pneg %p83
      %p187 = pneg %p80
      %p188 = pneg %p104
      %p189 = pneg %p101
      %p190 = pneg %p130
      %p191 = pneg %p127
      %p192 = scmp.lt.s32.totalorder %s15, 1
      %s193 = scalar_select %p192, %s15, 1
      %s194 = smul.addr %s193, 2
      %s195 = smul.addr %s194, 8
      %s196 = scalar_lea.vmem %s4, %s195
      %p197 = scmp.lt.s32.totalorder %s15, 1
      %s198 = scalar_select %p197, %s15, 1
      %s199 = smul.addr %s198, 8
      %s200 = scalar_lea.vmem %s0, %s199
      %p201 = scmp.lt.s32.totalorder %s15, 1
      %s202 = scalar_select %p201, %s15, 1
      %s203 = scalar_lea.vmem %s1, %s202
      %p204 = scmp.lt.s32.totalorder %s15, 1
      %s205 = scalar_select %p204, %s15, 1
      %s206 = smul.addr %s205, 2
      %s207 = smul.addr %s206, 8
      %s208 = scalar_lea.vmem %s4, %s207
      %v210 = vld [vmem:[%s200] sm:$0xff]
      %v211 = vpack.c.bf16 %v210, %v210
      %v212 = vld [vmem:[%s2] sm:$0xf]
      %v213 = vld [vmem:[%s2 + $0x4] sm:$0xf]
      %v214 = vld [vmem:[%s2 + $0x8] sm:$0xf]
      %v215 = vld [vmem:[%s2 + $0xc] sm:$0xf]
      %v220 = vunpack.c.l.b16 %v212
      %v221 = vunpack.c.l.b16 %v213
      %v222 = vunpack.c.l.b16 %v214
      %v223 = vunpack.c.l.b16 %v215
      %v224 = vpack.c.b16 %v221, %v220
      %v225 = vpack.c.b16 %v223, %v222
      %vm228 = vcmask 261120
      %v230 = vsel %vm228, %v211, 0
      %232 = vmatprep.subr.bf16.mxu0 0
      %233 = vmatpush1.bf16.msra.mxu0 %v224
      %234 = vmatprep.subr.bf16.mxu0 0
      %235 = vmatpush1.bf16.msra.mxu0 %v225
      %236 = vmatprep.subr.bf16.mxu0 0
      %237 = vmatpush1.bf16.msra.mxu0 0
      %238 = vmatprep.subr.bf16.mxu0 0
      %239 = vmatpush1.bf16.msra.mxu0 0
      %240 = vmatprep.subr.bf16.mxu0 0
      %241 = vmatpush1.bf16.msra.mxu0 0
      %242 = vmatprep.subr.bf16.mxu0 0
      %243 = vmatpush1.bf16.msra.mxu0 0
      %244 = vmatprep.subr.bf16.mxu0 0
      %245 = vmatpush1.bf16.msra.mxu0 0
      %246 = vmatprep.subr.bf16.mxu0 0
      %247 = vmatpush1.bf16.msra.mxu0 0
      %248 = vmatprep.subr.bf16.mxu0 0
      %249 = vmatpush1.bf16.msra.mxu0 0
      %250 = vmatprep.subr.bf16.mxu0 0
      %251 = vmatpush1.bf16.msra.mxu0 0
      %252 = vmatprep.subr.bf16.mxu0 0
      %253 = vmatpush1.bf16.msra.mxu0 0
      %254 = vmatprep.subr.bf16.mxu0 0
      %255 = vmatpush1.bf16.msra.mxu0 0
      %256 = vmatprep.subr.bf16.mxu0 0
      %257 = vmatpush1.bf16.msra.mxu0 0
      %258 = vmatprep.subr.bf16.mxu0 0
      %259 = vmatpush1.bf16.msra.mxu0 0
      %260 = vmatprep.subr.bf16.mxu0 0
      %261 = vmatpush1.bf16.msra.mxu0 0
      %262 = vmatprep.subr.bf16.mxu0 0
      %263 = vmatpush1.bf16.msra.mxu0 0
      %264 = vmatprep.mubr.bf16.mxu0 0
      %265 = vmatmul.mubr.bf16.gmra.mrb[0].mxu0 %v230
      %v266 = vpop.f32.mrb[0].mxu0
      %v267 = vadd.f32 0.0, %v266
      %v268 = vpop.f32.mrb[0].mxu0
      %v269 = vpop.f32.mrb[0].mxu0
      %v270 = vpop.f32.mrb[0].mxu0
      %271 = vdwg.mxu0
      %272 = vxpose.xlu0.b32.start [1/16] %v267, 128
      %273 = vxpose.xlu0.b32.cont [2/16] 0.0, 128
      %274 = vxpose.xlu0.b32.cont [3/16] 0.0, 128
      %275 = vxpose.xlu0.b32.cont [4/16] 0.0, 128
      %276 = vxpose.xlu0.b32.cont [5/16] 0.0, 128
      %277 = vxpose.xlu0.b32.cont [6/16] 0.0, 128
      %278 = vxpose.xlu0.b32.cont [7/16] 0.0, 128
      %279 = vxpose.xlu0.b32.cont [8/16] 0.0, 128
      %280 = vxpose.xlu0.b32.cont [9/16] 0.0, 128
      %281 = vxpose.xlu0.b32.cont [10/16] 0.0, 128
      %282 = vxpose.xlu0.b32.cont [11/16] 0.0, 128
      %283 = vxpose.xlu0.b32.cont [12/16] 0.0, 128
      %284 = vxpose.xlu0.b32.cont [13/16] 0.0, 128
      %285 = vxpose.xlu0.b32.cont [14/16] 0.0, 128
      %286 = vxpose.xlu0.b32.cont [15/16] 0.0, 128
      %287 = vxpose.xlu0.b32.end [16/16] 0.0, 128
      %v288 = vpop.trf.xlu0
      %v289 = vpop.trf.xlu0
      %v290 = vpop.trf.xlu0
      %v291 = vpop.trf.xlu0
      %v292 = vpop.trf.xlu0
      %v293 = vpop.trf.xlu0
      %v294 = vpop.trf.xlu0
      %v295 = vpop.trf.xlu0
      %v296 = vpop.trf.xlu0
      %v297 = vpop.trf.xlu0
      %v298 = vpop.trf.xlu0
      %v299 = vpop.trf.xlu0
      %v300 = vpop.trf.xlu0
      %v301 = vpop.trf.xlu0
      %v302 = vpop.trf.xlu0
      %v303 = vpop.trf.xlu0
      %v304 = vld [vmem:[%s203] sm:$0x1]
      %v306 = vlaneseq
      %v307 = vshrl.u32 %v306, 7
      %v308 = vsub.s32 0, %v307
      %v309 = vrot.slane %v304, %v308
      %v311 = vmul.f32 %v309, %v288
      %v312 = vmul.f32 %v309, %v289
      %vm313 = vcmask 64512
      %v314 = vsel %vm313, %v311, 0.0
      %315 = vadd.xlane.f32.xlu0 %v314
      %v316 = vpop.xlane.xlu0 %315
      %vm317 = vcmask 58368
      %v318 = vsel %vm317, %v312, 0.0
      %319 = vadd.xlane.f32.xlu0 %v318
      %v320 = vpop.xlane.xlu0 %319
      %vm321 = vcmask 57344
      %v322 = vsel %vm321, %v304, 0.0
      %323 = vadd.xlane.f32.xlu0 %v322
      %v324 = vpop.xlane.xlu0 %323
      %v325 = vmax.f32 %v324, 1.0
      %v326 = vrcp.pop %v325
      %v327 = vlaneseq
      %v328 = vshrl.u32 %v327, 7
      %v329 = vsub.s32 0, %v328
      %v330 = vrot.slane %v326, %v329
      %v331 = vmul.f32 %v316, %v330
      %v332 = vmul.f32 %v320, %v330
      %v333 = vlaneseq
      %v334 = vshrl.u32 %v333, 7
      %v335 = vadd.s32 %v334, 8
      %vm336 = vcmp.ge.s32.totalorder %v334, 2
      %vm337 = vcmp.ge.s32.totalorder %v335, 2
      %v338 = vsel %vm336, %v331, 0.0
      %v339 = vsel %vm337, %v332, 0.0
      %v340 = vld [vmem:[%s3] sm:$0xff]
      %v341 = vld [vmem:[%s3 + $0x8] sm:$0x3]
      %343 = vset.pattern.permute.xlu0 0
      %344 = vperm.xlu0 %343, %v340
      %v345 = vpop.permute.xlu0 %344
      %348 = vset.pattern.permute.xlu0 0
      %349 = vperm.xlu0 %348, %v341
      %v350 = vpop.permute.xlu0 %349
      %v352 = vadd.f32 %v288, %v345
      %v353 = vadd.f32 %v289, %v350
      %v354 = vadd.f32 %v352, %v338
      %v355 = vadd.f32 %v353, %v339
      %v356 = vxor.u32 %v354, 2147483648
      %v357 = vxor.u32 %v355, 2147483648
      %v358 = vmul.f32 %v356, 1.442695
      %v359 = vpow.pop %v358
      %v360 = vmul.f32 %v357, 1.442695
      %v361 = vpow.pop %v360
      %v362 = vadd.f32 %v359, 1.0
      %v363 = vadd.f32 %v361, 1.0
      %v364 = vrcp.pop %v362
      %v365 = vmul.f32 1.0, %v364
      %v366 = vrcp.pop %v363
      %v367 = vmul.f32 1.0, %v366
      %368 = vst.msk [vmem:[%s208] sm:$0xff] %vm313, %v365
      %369 = vst.msk [vmem:[%s208 + $0x8] sm:$0x3] %vm317, %v367
      %p370 = scmp.lt.s32.totalorder %s15, 1
      %s371 = scalar_select %p370, %s15, 1
      %s372 = smul.addr %s371, 2
      %s373 = smul.addr %s372, 8
      %s374 = scalar_lea.vmem %s4, %s373
      // Predicated region
      $region37: #{tpu_custom_call.1} parent=35 // pred_check
        %p375 = pneg %p127
      $region38: #{tpu_custom_call.1} parent=35 // pred_check_branch
        %377 = sbr.rel (%p375) target = $region40
      $region39: #{tpu_custom_call.1} parent=35 // pred_region
        _
      $region40: #{tpu_custom_call.1} parent=35 // pred_fallthru
        _
    $region36: #{tpu_custom_call.1} parent=5 // pred_fallthru
      _
    %p378 = scmp.le.s32.totalorder 2, %s10
    // Predicated region
    $region41: #{tpu_custom_call.1} parent=5 // pred_check
      %p379 = pneg %p378
    $region42: #{tpu_custom_call.1} parent=5 // pred_check_branch
      %381 = sbr.rel (%p379) target = $region44
    $region43: #{tpu_custom_call.1} parent=5 // pred_region
      %s382 = ssub.s32 %s10, 2
      // Predicated region
      $region45: #{tpu_custom_call.1} parent=43 // pred_check
        %p383 = pneg %p133
      $region46: #{tpu_custom_call.1} parent=43 // pred_check_branch
        %385 = sbr.rel (%p383) target = $region48
      $region47: #{tpu_custom_call.1} parent=43 // pred_region
        %p386 = scmp.lt.s32.totalorder %s16, 1
        %s387 = scalar_select %p386, %s16, 1
        %s388 = smul.addr %s387, 2
        %s389 = smul.addr %s388, 8
        %s390 = scalar_lea.vmem %s4, %s389
      $region48: #{tpu_custom_call.1} parent=43 // pred_fallthru
        _
    $region44: #{tpu_custom_call.1} parent=5 // pred_fallthru
      _
  $region6: #{tpu_custom_call.1} parent=0 // loop_footer
    %s14 = sadd.s32 1, %s10
  $region7: #{tpu_custom_call.1} parent=0 // loop_footer_branch
    %9 = sbr.rel target = $region3
  $region8: #{tpu_custom_call.1} parent=0 // loop_exit
    _

</llo_original>
